<compile_context>
chip_gen: v5e
topology: v5e:2x2
jax: 0.10.0
libtpu: 0.0.40
codegen_flags: <defaults>
</compile_context>

<pallas_src>
import jax
import jax.numpy as jnp
from jax.experimental import pallas as pl
from jax.experimental.pallas import tpu as pltpu


def net3_kernel(x_ref, w1_ref, b1_ref, w2_ref, b2_ref, w3_ref, b3_ref,
                wo_ref, bo_ref, o_ref):
    # x_ref: (TB, F) f32 batch tile; weights bf16; biases f32; output (TB, 1) f32.
    x = x_ref[...].astype(jnp.bfloat16)      # in-kernel cast (VPU, hidden under DMA)

    # MXU matmuls in bf16 with f32 accumulation; bias add / relu stay f32
    # (v5e has no bf16 VPU).
    h = jnp.dot(x, w1_ref[...], preferred_element_type=jnp.float32) + b1_ref[...]
    h = jnp.maximum(h, 0.0)                  # act_fn = relu; dropout = identity (eval)

    h = jnp.dot(h.astype(jnp.bfloat16), w2_ref[...],
                preferred_element_type=jnp.float32) + b2_ref[...]
    h = jnp.maximum(h, 0.0)

    h = jnp.dot(h.astype(jnp.bfloat16), w3_ref[...],
                preferred_element_type=jnp.float32) + b3_ref[...]
    h = jnp.maximum(h, 0.0)

    out = jnp.dot(h.astype(jnp.bfloat16), wo_ref[...],
                  preferred_element_type=jnp.float32) + bo_ref[...]
    # forward does act_fn(F.relu(output(x))) == relu(relu(.)) == relu(.)
    o_ref[...] = jnp.maximum(out, 0.0).astype(o_ref.dtype)


def net3_forward(x, params, *, block_b=1024):
    """Fused Net3 forward (eval mode). x: (B, n_features) f32 -> (B, 1) f32."""
    assert block_b % 8 == 0, "block_b must be a multiple of 8 (sublane constraint)"

    (w1, b1), (w2, b2), (w3, b3), (wo, bo) = params
    B, F = x.shape
    NH1, NH2, NH3 = w1.shape[1], w2.shape[1], w3.shape[1]
    NO = wo.shape[1]                                      # = 1

    # bf16 MXU weight operands; biases stay f32 (added post-accumulation).
    w1b = w1.astype(jnp.bfloat16)
    w2b = w2.astype(jnp.bfloat16)
    w3b = w3.astype(jnp.bfloat16)
    wob = wo.astype(jnp.bfloat16)

    # Batch tile: whole (sublane-padded) batch if it fits a single tile, else
    # block_b rows.  When B > block_b the grid automatically has >=2 steps, so
    # the "parallel" batch axis shards across both TensorCores on v7x.
    b_pad8 = pl.cdiv(B, 8) * 8
    tb = b_pad8 if b_pad8 <= block_b else block_b
    b_pad = pl.cdiv(B, tb) * tb
    if b_pad != B:
        # Ragged tail only: one extra HBM pass over the padded rows; padded
        # rows never interact with valid rows and are sliced off below.
        x = jnp.pad(x, ((0, b_pad - B), (0, 0)))

    grid = (b_pad // tb,)

    def resident(shape):
        # Weight/bias block never changes across grid steps -> stays in VMEM.
        return pl.BlockSpec(shape, lambda i: (0, 0))

    in_specs = [
        pl.BlockSpec((tb, F), lambda i: (i, 0)),          # x: tiled over batch
        resident((F, NH1)), resident((1, NH1)),
        resident((NH1, NH2)), resident((1, NH2)),
        resident((NH2, NH3)), resident((1, NH3)),
        resident((NH3, NO)), resident((1, NO)),
    ]
    out_specs = pl.BlockSpec((tb, NO), lambda i: (i, 0))  # real (tb, 1) output

    flops = 2 * b_pad * (F * NH1 + NH1 * NH2 + NH2 * NH3 + NH3 * NO)
    weight_bytes = 2 * (F * NH1 + NH1 * NH2 + NH2 * NH3 + NH3 * NO) \
        + 4 * (NH1 + NH2 + NH3 + NO)
    bytes_accessed = b_pad * (F * 4 + NO * 4) + weight_bytes

    out = pl.pallas_call(
        net3_kernel,
        out_shape=jax.ShapeDtypeStruct((b_pad, NO), jnp.float32),
        grid=grid,
        in_specs=in_specs,
        out_specs=out_specs,
        compiler_params=pltpu.CompilerParams(
            dimension_semantics=("parallel",),            # megacore split on v7x
        ),
        cost_estimate=pl.CostEstimate(
            flops=flops, transcendentals=0, bytes_accessed=bytes_accessed),
    )(x, w1b, b1, w2b, b2, w3b, b3, wob, bo)

    return out[:B, :]


def init_params(key, n_features=20, nh1=20, nh2=20, nh3=20):
    """Deterministic init mimicking nn.Linear's U(-1/sqrt(fan_in), 1/sqrt(fan_in))."""
    def linear(k, fan_in, fan_out):
        kw, kb = jax.random.split(k)
        bound = 1.0 / jnp.sqrt(fan_in)
        w = jax.random.uniform(kw, (fan_in, fan_out), jnp.float32, -bound, bound)
        b = jax.random.uniform(kb, (1, fan_out), jnp.float32, -bound, bound)
        return w, b

    k1, k2, k3, k4 = jax.random.split(key, 4)
    return (
        linear(k1, n_features, nh1),
        linear(k2, nh1, nh2),
        linear(k3, nh2, nh3),
        linear(k4, nh3, 1),
    )


def _ref_forward(x, params):
    """Plain-JAX reference with the same bf16-operand / f32-accumulate recipe."""
    (w1, b1), (w2, b2), (w3, b3), (wo, bo) = params
    h = jnp.maximum(jnp.dot(x.astype(jnp.bfloat16), w1.astype(jnp.bfloat16),
                            preferred_element_type=jnp.float32) + b1, 0.0)
    h = jnp.maximum(jnp.dot(h.astype(jnp.bfloat16), w2.astype(jnp.bfloat16),
                            preferred_element_type=jnp.float32) + b2, 0.0)
    h = jnp.maximum(jnp.dot(h.astype(jnp.bfloat16), w3.astype(jnp.bfloat16),
                            preferred_element_type=jnp.float32) + b3, 0.0)
    o = jnp.maximum(jnp.dot(h.astype(jnp.bfloat16), wo.astype(jnp.bfloat16),
                            preferred_element_type=jnp.float32) + bo, 0.0)
    return o


if __name__ == "__main__":
    key = jax.random.PRNGKey(0)
    kx, kp, kx2 = jax.random.split(key, 3)

    n_features = 20
    params = init_params(kp, n_features=n_features)

    # Small batch: single grid step (whole batch fits one tile).
    batch = 8
    x = jax.random.normal(kx, (batch, n_features), dtype=jnp.float32)
    out = net3_forward(x, params)
    jax.block_until_ready(out)
    assert out.shape == (batch, 1)
    ref = _ref_forward(x, params)
    assert jnp.allclose(out, ref, atol=1e-4, rtol=1e-4), "mismatch vs reference (small)"

    # Larger, non-multiple-of-tile batch with a small block_b: exercises the
    # multi-step grid + ragged-tail padding path.
    batch2 = 300
    x2 = jax.random.normal(kx2, (batch2, n_features), dtype=jnp.float32)
    out2 = net3_forward(x2, params, block_b=128)
    jax.block_until_ready(out2)
    assert out2.shape == (batch2, 1)
    ref2 = _ref_forward(x2, params)
    assert jnp.allclose(out2, ref2, atol=1e-4, rtol=1e-4), "mismatch vs reference (grid)"

    print("KERNEL_OK")
</pallas_src>

<mosaic_0001>
module attributes {stable_mosaic.version = 11 : i64} {
  func.func @net3_kernel(%arg0: i32, %arg1: memref<8x20xf32, #tpu.memory_space<vmem>>, %arg2: memref<20x20xbf16, #tpu.memory_space<vmem>>, %arg3: memref<1x20xf32, #tpu.memory_space<vmem>>, %arg4: memref<20x20xbf16, #tpu.memory_space<vmem>>, %arg5: memref<1x20xf32, #tpu.memory_space<vmem>>, %arg6: memref<20x20xbf16, #tpu.memory_space<vmem>>, %arg7: memref<1x20xf32, #tpu.memory_space<vmem>>, %arg8: memref<20x1xbf16, #tpu.memory_space<vmem>>, %arg9: memref<1x1xf32, #tpu.memory_space<vmem>>, %arg10: memref<8x1xf32, #tpu.memory_space<vmem>>) attributes {dimension_semantics = [#tpu.dimension_semantics<parallel>], iteration_bounds = array<i64: 1>, scalar_prefetch = 0 : i64, scratch_operands = 0 : i64, tpu.core_type = #tpu.core_type<tc>, window_params = [{transform_indices = @transform_0, window_bounds = array<i64: 8, 20>}, {pipeline_mode = #tpu.pipeline_mode<synchronous>, transform_indices = @transform_1, window_bounds = array<i64: 20, 20>}, {pipeline_mode = #tpu.pipeline_mode<synchronous>, transform_indices = @transform_2, window_bounds = array<i64: 1, 20>}, {pipeline_mode = #tpu.pipeline_mode<synchronous>, transform_indices = @transform_3, window_bounds = array<i64: 20, 20>}, {pipeline_mode = #tpu.pipeline_mode<synchronous>, transform_indices = @transform_4, window_bounds = array<i64: 1, 20>}, {pipeline_mode = #tpu.pipeline_mode<synchronous>, transform_indices = @transform_5, window_bounds = array<i64: 20, 20>}, {pipeline_mode = #tpu.pipeline_mode<synchronous>, transform_indices = @transform_6, window_bounds = array<i64: 1, 20>}, {pipeline_mode = #tpu.pipeline_mode<synchronous>, transform_indices = @transform_7, window_bounds = array<i64: 20, 1>}, {pipeline_mode = #tpu.pipeline_mode<synchronous>, transform_indices = @transform_8, window_bounds = array<i64: 1, 1>}, {transform_indices = @transform_9, window_bounds = array<i64: 8, 1>}]} {
    %c0 = arith.constant 0 : index
    %c0_0 = arith.constant 0 : index
    %0 = vector.load %arg1[%c0, %c0_0] : memref<8x20xf32, #tpu.memory_space<vmem>>, vector<8x20xf32>
    %1 = arith.truncf %0 : vector<8x20xf32> to vector<8x20xbf16>
    %c0_1 = arith.constant 0 : index
    %c0_2 = arith.constant 0 : index
    %2 = vector.load %arg2[%c0_1, %c0_2] : memref<20x20xbf16, #tpu.memory_space<vmem>>, vector<20x20xbf16>
    %cst = arith.constant dense<0.000000e+00> : vector<8x20xf32>
    %3 = tpu.matmul %1, %2, %cst {dimension_numbers = #tpu.dot_dimension_numbers<[1], [0], [0], [1], [0, 0, 1, 1], [], []>} : vector<8x20xbf16>, vector<20x20xbf16>, vector<8x20xf32> -> vector<8x20xf32>
    %c0_3 = arith.constant 0 : index
    %c0_4 = arith.constant 0 : index
    %4 = vector.load %arg3[%c0_3, %c0_4] : memref<1x20xf32, #tpu.memory_space<vmem>>, vector<1x20xf32>
    %5 = vector.broadcast %4 : vector<1x20xf32> to vector<8x20xf32>
    %6 = arith.addf %3, %5 : vector<8x20xf32>
    %cst_5 = arith.constant 0.000000e+00 : f32
    %7 = vector.broadcast %cst_5 : f32 to vector<8x20xf32>
    %8 = arith.maximumf %6, %7 : vector<8x20xf32>
    %9 = arith.truncf %8 : vector<8x20xf32> to vector<8x20xbf16>
    %c0_6 = arith.constant 0 : index
    %c0_7 = arith.constant 0 : index
    %10 = vector.load %arg4[%c0_6, %c0_7] : memref<20x20xbf16, #tpu.memory_space<vmem>>, vector<20x20xbf16>
    %cst_8 = arith.constant dense<0.000000e+00> : vector<8x20xf32>
    %11 = tpu.matmul %9, %10, %cst_8 {dimension_numbers = #tpu.dot_dimension_numbers<[1], [0], [0], [1], [0, 0, 1, 1], [], []>} : vector<8x20xbf16>, vector<20x20xbf16>, vector<8x20xf32> -> vector<8x20xf32>
    %c0_9 = arith.constant 0 : index
    %c0_10 = arith.constant 0 : index
    %12 = vector.load %arg5[%c0_9, %c0_10] : memref<1x20xf32, #tpu.memory_space<vmem>>, vector<1x20xf32>
    %13 = vector.broadcast %12 : vector<1x20xf32> to vector<8x20xf32>
    %14 = arith.addf %11, %13 : vector<8x20xf32>
    %cst_11 = arith.constant 0.000000e+00 : f32
    %15 = vector.broadcast %cst_11 : f32 to vector<8x20xf32>
    %16 = arith.maximumf %14, %15 : vector<8x20xf32>
    %17 = arith.truncf %16 : vector<8x20xf32> to vector<8x20xbf16>
    %c0_12 = arith.constant 0 : index
    %c0_13 = arith.constant 0 : index
    %18 = vector.load %arg6[%c0_12, %c0_13] : memref<20x20xbf16, #tpu.memory_space<vmem>>, vector<20x20xbf16>
    %cst_14 = arith.constant dense<0.000000e+00> : vector<8x20xf32>
    %19 = tpu.matmul %17, %18, %cst_14 {dimension_numbers = #tpu.dot_dimension_numbers<[1], [0], [0], [1], [0, 0, 1, 1], [], []>} : vector<8x20xbf16>, vector<20x20xbf16>, vector<8x20xf32> -> vector<8x20xf32>
    %c0_15 = arith.constant 0 : index
    %c0_16 = arith.constant 0 : index
    %20 = vector.load %arg7[%c0_15, %c0_16] : memref<1x20xf32, #tpu.memory_space<vmem>>, vector<1x20xf32>
    %21 = vector.broadcast %20 : vector<1x20xf32> to vector<8x20xf32>
    %22 = arith.addf %19, %21 : vector<8x20xf32>
    %cst_17 = arith.constant 0.000000e+00 : f32
    %23 = vector.broadcast %cst_17 : f32 to vector<8x20xf32>
    %24 = arith.maximumf %22, %23 : vector<8x20xf32>
    %25 = arith.truncf %24 : vector<8x20xf32> to vector<8x20xbf16>
    %c0_18 = arith.constant 0 : index
    %c0_19 = arith.constant 0 : index
    %26 = vector.load %arg8[%c0_18, %c0_19] : memref<20x1xbf16, #tpu.memory_space<vmem>>, vector<20x1xbf16>
    %cst_20 = arith.constant dense<0.000000e+00> : vector<8x1xf32>
    %27 = tpu.matmul %25, %26, %cst_20 {dimension_numbers = #tpu.dot_dimension_numbers<[1], [0], [0], [1], [0, 0, 1, 1], [], []>} : vector<8x20xbf16>, vector<20x1xbf16>, vector<8x1xf32> -> vector<8x1xf32>
    %c0_21 = arith.constant 0 : index
    %c0_22 = arith.constant 0 : index
    %28 = vector.load %arg9[%c0_21, %c0_22] : memref<1x1xf32, #tpu.memory_space<vmem>>, vector<1x1xf32>
    %29 = vector.broadcast %28 : vector<1x1xf32> to vector<8x1xf32>
    %30 = arith.addf %27, %29 : vector<8x1xf32>
    %cst_23 = arith.constant 0.000000e+00 : f32
    %31 = vector.broadcast %cst_23 : f32 to vector<8x1xf32>
    %32 = arith.maximumf %30, %31 : vector<8x1xf32>
    %c0_24 = arith.constant 0 : index
    %c0_25 = arith.constant 0 : index
    %33 = vector.load %arg10[%c0_24, %c0_25] : memref<8x1xf32, #tpu.memory_space<vmem>>, vector<8x1xf32>
    tpu.vector_store %arg10[%c0_24, %c0_25], %32 {strides = array<i32>} : memref<8x1xf32, #tpu.memory_space<vmem>>, vector<8x1xf32>,
    return
  }
  func.func @transform_0(%arg0: i32) -> (i32, i32) {
    %c0_i32 = arith.constant 0 : i32
    %c0_i32_0 = arith.constant 0 : i32
    return %arg0, %c0_i32 : i32, i32
  }
  func.func @transform_1(%arg0: i32) -> (i32, i32) {
    %c0_i32 = arith.constant 0 : i32
    %c0_i32_0 = arith.constant 0 : i32
    %c0_i32_1 = arith.constant 0 : i32
    return %c0_i32, %c0_i32_0 : i32, i32
  }
  func.func @transform_2(%arg0: i32) -> (i32, i32) {
    %c0_i32 = arith.constant 0 : i32
    %c0_i32_0 = arith.constant 0 : i32
    %c0_i32_1 = arith.constant 0 : i32
    return %c0_i32, %c0_i32_0 : i32, i32
  }
  func.func @transform_3(%arg0: i32) -> (i32, i32) {
    %c0_i32 = arith.constant 0 : i32
    %c0_i32_0 = arith.constant 0 : i32
    %c0_i32_1 = arith.constant 0 : i32
    return %c0_i32, %c0_i32_0 : i32, i32
  }
  func.func @transform_4(%arg0: i32) -> (i32, i32) {
    %c0_i32 = arith.constant 0 : i32
    %c0_i32_0 = arith.constant 0 : i32
    %c0_i32_1 = arith.constant 0 : i32
    return %c0_i32, %c0_i32_0 : i32, i32
  }
  func.func @transform_5(%arg0: i32) -> (i32, i32) {
    %c0_i32 = arith.constant 0 : i32
    %c0_i32_0 = arith.constant 0 : i32
    %c0_i32_1 = arith.constant 0 : i32
    return %c0_i32, %c0_i32_0 : i32, i32
  }
  func.func @transform_6(%arg0: i32) -> (i32, i32) {
    %c0_i32 = arith.constant 0 : i32
    %c0_i32_0 = arith.constant 0 : i32
    %c0_i32_1 = arith.constant 0 : i32
    return %c0_i32, %c0_i32_0 : i32, i32
  }
  func.func @transform_7(%arg0: i32) -> (i32, i32) {
    %c0_i32 = arith.constant 0 : i32
    %c0_i32_0 = arith.constant 0 : i32
    %c0_i32_1 = arith.constant 0 : i32
    return %c0_i32, %c0_i32_0 : i32, i32
  }
  func.func @transform_8(%arg0: i32) -> (i32, i32) {
    %c0_i32 = arith.constant 0 : i32
    %c0_i32_0 = arith.constant 0 : i32
    %c0_i32_1 = arith.constant 0 : i32
    return %c0_i32, %c0_i32_0 : i32, i32
  }
  func.func @transform_9(%arg0: i32) -> (i32, i32) {
    %c0_i32 = arith.constant 0 : i32
    %c0_i32_0 = arith.constant 0 : i32
    return %arg0, %c0_i32 : i32, i32
  }
}

</mosaic_0001>

<llo_original>
// kernel: tpu_custom_call.1
$region0: #{tpu_custom_call.1}
  #allocation0 [shape = 'u32[]', space=smem, size = 0x4, offset = 0x4, fixed_abs, tag = 'smem constant byte address 0x4 - core index']
  #allocation1 [shape = 'u32[72,128]{1,0:T(1,128)}', space=vmem, size = 0x9000, scoped, tag = 'internal scratch']
  #allocation2 [shape = 'f32[1,1]{1,0:T(1,128)S(1)}', space=vmem, size = 0x200, scoped, tag = 'scoped memory for tpu_custom_call.1']
  %s0 = inlined_call_operand.hbm [shape: f32[8,20], index: 0, kind: input, shape index: {}]
  %s1 = inlined_call_operand.vmem [shape: bf16[20,20], index: 1, kind: input, shape index: {}]
  %s2 = inlined_call_operand.vmem [shape: f32[1,20], index: 2, kind: input, shape index: {}]
  %s3 = inlined_call_operand.hbm [shape: bf16[20,20], index: 3, kind: input, shape index: {}]
  %s4 = inlined_call_operand.vmem [shape: f32[1,20], index: 4, kind: input, shape index: {}]
  %s5 = inlined_call_operand.hbm [shape: bf16[20,20], index: 5, kind: input, shape index: {}]
  %s6 = inlined_call_operand.vmem [shape: f32[1,20], index: 6, kind: input, shape index: {}]
  %s7 = inlined_call_operand.vmem [shape: bf16[20,1], index: 7, kind: input, shape index: {}]
  %s8 = inlined_call_operand.<no memory space> [shape: f32[1,1], index: 8, kind: input, shape index: {}]
  %s9 = inlined_call_operand.vmem [shape: f32[8,1], index: 9, kind: output, shape index: {}]
  %s10 = sld [smem:[#allocation0]]
  $region58: #{tpu_custom_call.1} parent=0
    _
  %s12 = ssub.s32 1, %s10
  %s13 = scalar_select 0, %s12, %s10
  %v14 = vstv %s8
  %15 = vst [vmem:[#allocation2] sm:$0x1] %v14
  $region1: #{tpu_custom_call.1} parent=0
    #allocation3 [shape = 'u8[4096]{0}', space=vmem, size = 0x1000, scoped, tag = 'input window, operand 0, single buffered']
    #allocation4 [shape = 's32[1]{0}', space=sflag, size = 0x4, scoped, tag = 'scoped memory for tpu_custom_call.1']
    #allocation5 [shape = 'u8[6144]{0}', space=vmem, size = 0x1800, scoped, tag = 'input window, operand 3, single buffered']
    #allocation6 [shape = 's32[1]{0}', space=sflag, size = 0x4, scoped, tag = 'scoped memory for tpu_custom_call.1']
    #allocation7 [shape = 'u8[6144]{0}', space=vmem, size = 0x1800, scoped, tag = 'input window, operand 5, single buffered']
    %16 = vsyncpa [#allocation4], 0
    %17 = vsyncpa [#allocation6], 0
    // Predicated region
    $region2: #{tpu_custom_call.1} parent=1 // pred_check
      _
    $region3: #{tpu_custom_call.1} parent=1 // pred_check_branch
      %19 = sbr.rel (0) target = $region5
    $region4: #{tpu_custom_call.1} parent=1 // pred_region
      %21 = vsyncadd [#allocation4], 0
      %s23 = sshll.u32 %s0, 4
      %s24 = int_to_ptr.hbm [resolvable:$true] %s23
      %s25 = sshll.u32 [#allocation3], 4
      %s26 = int_to_ptr.vmem [resolvable:$true] %s25
      %28 = dma.hbm_to_vmem [thread:$0]  %s24, 128, %s26, [#allocation4]
    $region5: #{tpu_custom_call.1} parent=1 // pred_fallthru
      _
    // Predicated region
    $region6: #{tpu_custom_call.1} parent=1 // pred_check
      _
    $region7: #{tpu_custom_call.1} parent=1 // pred_check_branch
      %30 = sbr.rel (0) target = $region9
    $region8: #{tpu_custom_call.1} parent=1 // pred_region
      _
    $region9: #{tpu_custom_call.1} parent=1 // pred_fallthru
      _
    // Predicated region
    $region10: #{tpu_custom_call.1} parent=1 // pred_check
      _
    $region11: #{tpu_custom_call.1} parent=1 // pred_check_branch
      %32 = sbr.rel (0) target = $region13
    $region12: #{tpu_custom_call.1} parent=1 // pred_region
      _
    $region13: #{tpu_custom_call.1} parent=1 // pred_fallthru
      _
    // Predicated region
    $region14: #{tpu_custom_call.1} parent=1 // pred_check
      _
    $region15: #{tpu_custom_call.1} parent=1 // pred_check_branch
      %34 = sbr.rel (0) target = $region17
    $region16: #{tpu_custom_call.1} parent=1 // pred_region
      %36 = vsyncadd [#allocation6], 0
      %s37 = sshll.u32 %s3, 4
      %s38 = int_to_ptr.hbm [resolvable:$true] %s37
      %s39 = sshll.u32 [#allocation5], 4
      %s40 = int_to_ptr.vmem [resolvable:$true] %s39
      %45 = dma.hbm_to_vmem [thread:$0]  %s38, 192, %s40, [#allocation6], 64, 64, 4
    $region17: #{tpu_custom_call.1} parent=1 // pred_fallthru
      _
    // Predicated region
    $region18: #{tpu_custom_call.1} parent=1 // pred_check
      _
    $region19: #{tpu_custom_call.1} parent=1 // pred_check_branch
      %47 = sbr.rel (0) target = $region21
    $region20: #{tpu_custom_call.1} parent=1 // pred_region
      _
    $region21: #{tpu_custom_call.1} parent=1 // pred_fallthru
      _
    // Predicated region
    $region22: #{tpu_custom_call.1} parent=1 // pred_check
      _
    $region23: #{tpu_custom_call.1} parent=1 // pred_check_branch
      %49 = sbr.rel (0) target = $region25
    $region24: #{tpu_custom_call.1} parent=1 // pred_region
      %51 = vsyncadd [#allocation6], 0
      %s52 = sshll.u32 %s5, 4
      %s53 = int_to_ptr.hbm [resolvable:$true] %s52
      %s54 = sshll.u32 [#allocation7], 4
      %s55 = int_to_ptr.vmem [resolvable:$true] %s54
      %60 = dma.hbm_to_vmem [thread:$0]  %s53, 192, %s55, [#allocation6], 64, 64, 4
    $region25: #{tpu_custom_call.1} parent=1 // pred_fallthru
      _
    // Predicated region
    $region26: #{tpu_custom_call.1} parent=1 // pred_check
      _
    $region27: #{tpu_custom_call.1} parent=1 // pred_check_branch
      %62 = sbr.rel (0) target = $region29
    $region28: #{tpu_custom_call.1} parent=1 // pred_region
      _
    $region29: #{tpu_custom_call.1} parent=1 // pred_fallthru
      _
    // Predicated region
    $region30: #{tpu_custom_call.1} parent=1 // pred_check
      _
    $region31: #{tpu_custom_call.1} parent=1 // pred_check_branch
      %64 = sbr.rel (0) target = $region33
    $region32: #{tpu_custom_call.1} parent=1 // pred_region
      _
    $region33: #{tpu_custom_call.1} parent=1 // pred_fallthru
      _
    // Predicated region
    $region34: #{tpu_custom_call.1} parent=1 // pred_check
      _
    $region35: #{tpu_custom_call.1} parent=1 // pred_check_branch
      %66 = sbr.rel (0) target = $region37
    $region36: #{tpu_custom_call.1} parent=1 // pred_region
      _
    $region37: #{tpu_custom_call.1} parent=1 // pred_fallthru
      _
    // Predicated region
    $region38: #{tpu_custom_call.1} parent=1 // pred_check
      _
    $region39: #{tpu_custom_call.1} parent=1 // pred_check_branch
      %68 = sbr.rel (0) target = $region41
    $region40: #{tpu_custom_call.1} parent=1 // pred_region
      %70 = dma.done [#allocation4], 128
    $region41: #{tpu_custom_call.1} parent=1 // pred_fallthru
      _
    // Predicated region
    $region42: #{tpu_custom_call.1} parent=1 // pred_check
      _
    $region43: #{tpu_custom_call.1} parent=1 // pred_check_branch
      %72 = sbr.rel (0) target = $region45
    $region44: #{tpu_custom_call.1} parent=1 // pred_region
      %74 = dma.done [#allocation6], 192
    $region45: #{tpu_custom_call.1} parent=1 // pred_fallthru
      _
    // Predicated region
    $region46: #{tpu_custom_call.1} parent=1 // pred_check
      _
    $region47: #{tpu_custom_call.1} parent=1 // pred_check_branch
      %76 = sbr.rel (0) target = $region49
    $region48: #{tpu_custom_call.1} parent=1 // pred_region
      %78 = dma.done [#allocation6], 192
    $region49: #{tpu_custom_call.1} parent=1 // pred_fallthru
      _
    %v80 = vld [vmem:[#allocation3] sm:$0xff]
    %v81 = vpack.c.bf16 %v80, %v80
    %v82 = vld [vmem:[%s1] sm:$0xf]
    %v83 = vld [vmem:[%s1 + $0x4] sm:$0xf]
    %v84 = vld [vmem:[%s1 + $0x8] sm:$0x3]
    %v85 = vld [vmem:[%s2] sm:$0x1]
    %v87 = vperm.slane %v85, 0
    %v92 = vunpack.c.l.b16 %v82
    %v93 = vunpack.c.l.b16 %v83
    %v94 = vunpack.c.l.b16 %v84
    %v95 = vpack.c.b16 %v93, %v92
    %v96 = vpack.c.b16 %v94, %v94
    %vm98 = vcmask 162816
    %v100 = vsel %vm98, %v81, 0
    %vm102 = vcmask 1041408
    %v104 = vsel %vm102, %v96, 0
    %106 = vmatpush.bf16.msra.mxu0 0
    %107 = vmatpush.bf16.msra.mxu0 0
    %108 = vmatpush.bf16.msra.mxu0 0
    %109 = vmatpush.bf16.msra.mxu0 0
    %110 = vmatpush.bf16.msra.mxu0 0
    %111 = vmatpush.bf16.msra.mxu0 0
    %112 = vmatpush.bf16.msra.mxu0 %v104
    %113 = vmatpush.bf16.msra.mxu0 %v95
    %114 = vmatmul.bf16.gmra.mxu0 %v100
    %v115 = vpop.f32.mrf.mxu0
    %v116 = vadd.f32 %v87, %v115
    %v117 = vpop.f32.mrf.mxu0
    %118 = vdwg.mxu0
    %v119 = vmax.f32 %v116, 0.0
    %v120 = vpack.c.bf16 %v119, %v119
    %v121 = vld [vmem:[#allocation5] sm:$0xf]
    %v122 = vld [vmem:[#allocation5 + $0x4] sm:$0xf]
    %v123 = vld [vmem:[#allocation5 + $0x8] sm:$0x3]
    %v124 = vld [vmem:[%s4] sm:$0x1]
    %v126 = vperm.slane %v124, 0
    %v131 = vunpack.c.l.b16 %v121
    %v132 = vunpack.c.l.b16 %v122
    %v133 = vunpack.c.l.b16 %v123
    %v134 = vpack.c.b16 %v132, %v131
    %v135 = vpack.c.b16 %v133, %v133
    %v138 = vsel %vm98, %v120, 0
    %v141 = vsel %vm102, %v135, 0
    %143 = vmatpush.bf16.msra.mxu0 0
    %144 = vmatpush.bf16.msra.mxu0 0
    %145 = vmatpush.bf16.msra.mxu0 0
    %146 = vmatpush.bf16.msra.mxu0 0
    %147 = vmatpush.bf16.msra.mxu0 0
    %148 = vmatpush.bf16.msra.mxu0 0
    %149 = vmatpush.bf16.msra.mxu0 %v141
    %150 = vmatpush.bf16.msra.mxu0 %v134
    %151 = vmatmul.bf16.gmra.mxu0 %v138
    %v152 = vpop.f32.mrf.mxu0
    %v153 = vadd.f32 %v126, %v152
    %v154 = vpop.f32.mrf.mxu0
    %155 = vdwg.mxu0
    %v156 = vmax.f32 %v153, 0.0
    %v157 = vpack.c.bf16 %v156, %v156
    %v158 = vld [vmem:[#allocation7] sm:$0xf]
    %v159 = vld [vmem:[#allocation7 + $0x4] sm:$0xf]
    %v160 = vld [vmem:[#allocation7 + $0x8] sm:$0x3]
    %v161 = vld [vmem:[%s6] sm:$0x1]
    %v163 = vperm.slane %v161, 0
    %v168 = vunpack.c.l.b16 %v158
    %v169 = vunpack.c.l.b16 %v159
    %v170 = vunpack.c.l.b16 %v160
    %v171 = vpack.c.b16 %v169, %v168
    %v172 = vpack.c.b16 %v170, %v170
    %v175 = vsel %vm98, %v157, 0
    %v178 = vsel %vm102, %v172, 0
    %180 = vmatpush.bf16.msra.mxu0 0
    %181 = vmatpush.bf16.msra.mxu0 0
    %182 = vmatpush.bf16.msra.mxu0 0
    %183 = vmatpush.bf16.msra.mxu0 0
    %184 = vmatpush.bf16.msra.mxu0 0
    %185 = vmatpush.bf16.msra.mxu0 0
    %186 = vmatpush.bf16.msra.mxu0 %v178
    %187 = vmatpush.bf16.msra.mxu0 %v171
    %188 = vmatmul.bf16.gmra.mxu0 %v175
    %v189 = vpop.f32.mrf.mxu0
    %v190 = vadd.f32 %v163, %v189
    %v191 = vpop.f32.mrf.mxu0
    %192 = vdwg.mxu0
    %v193 = vmax.f32 %v190, 0.0
    %v194 = vpack.c.bf16 %v193, %v193
    %v195 = vld [vmem:[%s7] sm:$0xf]
    %v196 = vld [vmem:[%s7 + $0x4] sm:$0xf]
    %v197 = vld [vmem:[%s7 + $0x8] sm:$0x3]
    %v198 = vld [vmem:[#allocation2] sm:$0x1]
    %v200 = vperm.slane %v198, 0
    %v205 = vunpack.c.l.b16 %v195
    %v206 = vunpack.c.l.b16 %v196
    %v207 = vunpack.c.l.b16 %v197
    %v208 = vpack.c.b16 %v206, %v205
    %v209 = vpack.c.b16 %v207, %v207
    %v212 = vsel %vm98, %v194, 0
    %v215 = vsel %vm102, %v209, 0
    %217 = vmatpush.bf16.msra.mxu0 0
    %218 = vmatpush.bf16.msra.mxu0 0
    %219 = vmatpush.bf16.msra.mxu0 0
    %220 = vmatpush.bf16.msra.mxu0 0
    %221 = vmatpush.bf16.msra.mxu0 0
    %222 = vmatpush.bf16.msra.mxu0 0
    %223 = vmatpush.bf16.msra.mxu0 %v215
    %224 = vmatpush.bf16.msra.mxu0 %v208
    %225 = vmatmul.bf16.gmra.mxu0 %v212
    %v226 = vpop.f32.mrf.mxu0
    %v227 = vadd.f32 %v200, %v226
    %v228 = vpop.f32.mrf.mxu0
    %229 = vdwg.mxu0
    %v230 = vmax.f32 %v227, 0.0
    %vm231 = vcmask 7168
    %232 = vst.msk [vmem:[%s9] sm:$0xff] %vm231, %v230
    // Predicated region
    $region50: #{tpu_custom_call.1} parent=1 // pred_check
      _
    $region51: #{tpu_custom_call.1} parent=1 // pred_check_branch
      %234 = sbr.rel (0) target = $region53
    $region52: #{tpu_custom_call.1} parent=1 // pred_region
      _
    $region53: #{tpu_custom_call.1} parent=1 // pred_fallthru
      _
    // Predicated region
    $region54: #{tpu_custom_call.1} parent=1 // pred_check
      _
    $region55: #{tpu_custom_call.1} parent=1 // pred_check_branch
      %236 = sbr.rel (0) target = $region57
    $region56: #{tpu_custom_call.1} parent=1 // pred_region
      _
    $region57: #{tpu_custom_call.1} parent=1 // pred_fallthru
      _
    %237 = vsyncpa [#allocation4], 1
    %238 = vsyncpa [#allocation6], 1

</llo_original>
